<compile_context>
chip_gen: v5e
topology: v5e:2x2
jax: 0.10.0
libtpu: 0.0.40
codegen_flags: <defaults>
</compile_context>

<pallas_src>
import functools

import jax
import jax.numpy as jnp
from jax.experimental import pallas as pl
from jax.experimental.pallas import tpu as pltpu


def dqn_kernel(x_ref,
               w1_ref, b1_ref,
               w2_ref, b2_ref,
               w3_ref, b3_ref,
               w4_ref, b4_ref,
               o_ref):
    def hidden_layer(h_bf16, w_ref, b_ref):
        acc = jnp.dot(h_bf16, w_ref[...], preferred_element_type=jnp.float32)
        # Fused epilogue: bias-add + ReLU + bf16 down-cast in one pass.
        return jnp.maximum(acc + b_ref[...], 0.0).astype(jnp.bfloat16)

    h = x_ref[...].astype(jnp.bfloat16)            # dropout == identity (eval)
    h = hidden_layer(h, w1_ref, b1_ref)            # fc1 + ReLU
    h = hidden_layer(h, w2_ref, b2_ref)            # fc2 + ReLU
    h = hidden_layer(h, w3_ref, b3_ref)            # fc3 + ReLU
    out = jnp.dot(h, w4_ref[...], preferred_element_type=jnp.float32)
    o_ref[...] = (out + b4_ref[...]).astype(o_ref.dtype)   # fc4, no activation


def _round_up(n, m):
    return ((n + m - 1) // m) * m


def _resident_spec(arr):
    """Full-array block with a constant block index -> stays resident in VMEM
    and is DMA'd exactly once across the batch grid."""
    ndim = arr.ndim
    return pl.BlockSpec(arr.shape, lambda i, _n=ndim: (0,) * _n)


def _select_batch_tile(B, tile_b):
    """Pick a hardware-friendly batch tile (multiple of 8, 128-aligned when
    large) and the padded batch size."""
    b_pad8 = _round_up(B, 8)
    tile_b = max(8, _round_up(tile_b, 8))          # (8,128) sublane rule
    if b_pad8 <= tile_b:
        if b_pad8 >= 512:
            # Whole batch would be one grid step; split it so the "parallel"
            # axis has >= 2 steps (v7x megacore uses both TensorCores).
            tile_b = _round_up(pl.cdiv(b_pad8, 2), 128)
        else:
            tile_b = b_pad8
    else:
        # Balance the steps so the last one isn't nearly empty; keep the M
        # tile 128-aligned when large so full 128-row MXU passes are fed.
        steps = pl.cdiv(b_pad8, tile_b)
        per = pl.cdiv(b_pad8, steps)
        tile_b = _round_up(per, 128 if per >= 128 else 8)
    b_pad = _round_up(B, tile_b)
    return tile_b, b_pad


@functools.partial(jax.jit, static_argnames=("tile_b",))
def dqn_forward(x, params, tile_b=2048):
    """x: (B, state_dim) f32.
    params: w{1..4} bf16 (in, out), b{1..4} f32 (1, out)."""
    B, state_dim = x.shape
    hidden_dim = params["w1"].shape[1]
    action_dim = params["w4"].shape[1]

    tile_b, b_pad = _select_batch_tile(B, tile_b)
    if b_pad != B:
        x = jnp.pad(x, ((0, b_pad - B), (0, 0)))
    grid = (b_pad // tile_b,)

    args = (x,
            params["w1"], params["b1"],
            params["w2"], params["b2"],
            params["w3"], params["b3"],
            params["w4"], params["b4"])

    in_specs = [pl.BlockSpec((tile_b, state_dim), lambda i: (i, 0))]
    in_specs += [_resident_spec(a) for a in args[1:]]
    out_spec = pl.BlockSpec((tile_b, action_dim), lambda i: (i, 0))

    flops = 2 * b_pad * (state_dim * hidden_dim
                         + 2 * hidden_dim * hidden_dim
                         + hidden_dim * action_dim)
    bytes_accessed = (x.size * x.dtype.itemsize
                      + sum(int(a.size) * a.dtype.itemsize for a in args[1:])
                      + b_pad * action_dim * 4)
    cost = pl.CostEstimate(flops=flops, transcendentals=0,
                           bytes_accessed=bytes_accessed)

    out = pl.pallas_call(
        dqn_kernel,
        out_shape=jax.ShapeDtypeStruct((b_pad, action_dim), jnp.float32),
        grid=grid,
        in_specs=in_specs,
        out_specs=out_spec,
        compiler_params=pltpu.CompilerParams(
            dimension_semantics=("parallel",)),
        cost_estimate=cost,
    )(*args)
    return out[:B]


def init_dqn_params(key, state_dim, action_dim, hidden_dim):
    """Deterministic init mirroring nn.Linear default (uniform +/- 1/sqrt(fan_in)).
    Weights stored as bf16 (in_features, out_features); biases f32 (1, out)."""
    dims = [(state_dim, hidden_dim),
            (hidden_dim, hidden_dim),
            (hidden_dim, hidden_dim),
            (hidden_dim, action_dim)]
    params = {}
    for i, (fan_in, fan_out) in enumerate(dims, start=1):
        key, kw, kb = jax.random.split(key, 3)
        bound = 1.0 / (fan_in ** 0.5)
        params[f"w{i}"] = jax.random.uniform(
            kw, (fan_in, fan_out), jnp.float32, -bound, bound).astype(jnp.bfloat16)
        params[f"b{i}"] = jax.random.uniform(
            kb, (1, fan_out), jnp.float32, -bound, bound)
    return params


def dqn_forward_ref(x, params):
    """Pure-JAX reference mirroring the kernel's bf16-matmul / f32-accumulate path."""
    def layer(h, w, b, relu):
        y = jnp.dot(h.astype(jnp.bfloat16), w,
                    preferred_element_type=jnp.float32) + b
        return jnp.maximum(y, 0.0) if relu else y
    h = layer(x, params["w1"], params["b1"], True)
    h = layer(h, params["w2"], params["b2"], True)
    h = layer(h, params["w3"], params["b3"], True)
    return layer(h, params["w4"], params["b4"], False)


if __name__ == "__main__":
    # Small, module-consistent shapes: batch=20, state_dim=32, hidden=256
    # (module default), actions=8.
    batch, state_dim, action_dim, hidden_dim = 20, 32, 8, 256

    key = jax.random.PRNGKey(0)
    key, kx = jax.random.split(key)
    x = jax.random.normal(kx, (batch, state_dim), jnp.float32)
    params = init_dqn_params(key, state_dim, action_dim, hidden_dim)

    ref = dqn_forward_ref(x, params)

    # 1) Default tile path (whole small batch in one tile).
    out_default = jax.block_until_ready(dqn_forward(x, params))
    # 2) Tiny explicit tile (tile_b=8) to exercise the multi-step grid and the
    #    batch-padding path.
    out_tiled = jax.block_until_ready(dqn_forward(x, params, tile_b=8))

    assert out_default.shape == (batch, action_dim)
    assert out_tiled.shape == (batch, action_dim)
    assert jnp.allclose(out_default, ref, atol=5e-3, rtol=5e-3), "mismatch (default tile)"
    assert jnp.allclose(out_tiled, ref, atol=5e-3, rtol=5e-3), "mismatch (tile_b=8)"

    print("KERNEL_OK")
</pallas_src>

<mosaic_0001>
module attributes {stable_mosaic.version = 11 : i64} {
  func.func @dqn_kernel(%arg0: i32, %arg1: memref<24x32xf32, #tpu.memory_space<vmem>>, %arg2: memref<32x256xbf16, #tpu.memory_space<vmem>>, %arg3: memref<1x256xf32, #tpu.memory_space<vmem>>, %arg4: memref<256x256xbf16, #tpu.memory_space<vmem>>, %arg5: memref<1x256xf32, #tpu.memory_space<vmem>>, %arg6: memref<256x256xbf16, #tpu.memory_space<vmem>>, %arg7: memref<1x256xf32, #tpu.memory_space<vmem>>, %arg8: memref<256x8xbf16, #tpu.memory_space<vmem>>, %arg9: memref<1x8xf32, #tpu.memory_space<vmem>>, %arg10: memref<24x8xf32, #tpu.memory_space<vmem>>) attributes {dimension_semantics = [#tpu.dimension_semantics<parallel>], iteration_bounds = array<i64: 1>, scalar_prefetch = 0 : i64, scratch_operands = 0 : i64, tpu.core_type = #tpu.core_type<tc>, window_params = [{transform_indices = @transform_0, window_bounds = array<i64: 24, 32>}, {pipeline_mode = #tpu.pipeline_mode<synchronous>, transform_indices = @transform_1, window_bounds = array<i64: 32, 256>}, {pipeline_mode = #tpu.pipeline_mode<synchronous>, transform_indices = @transform_2, window_bounds = array<i64: 1, 256>}, {pipeline_mode = #tpu.pipeline_mode<synchronous>, transform_indices = @transform_3, window_bounds = array<i64: 256, 256>}, {pipeline_mode = #tpu.pipeline_mode<synchronous>, transform_indices = @transform_4, window_bounds = array<i64: 1, 256>}, {pipeline_mode = #tpu.pipeline_mode<synchronous>, transform_indices = @transform_5, window_bounds = array<i64: 256, 256>}, {pipeline_mode = #tpu.pipeline_mode<synchronous>, transform_indices = @transform_6, window_bounds = array<i64: 1, 256>}, {pipeline_mode = #tpu.pipeline_mode<synchronous>, transform_indices = @transform_7, window_bounds = array<i64: 256, 8>}, {pipeline_mode = #tpu.pipeline_mode<synchronous>, transform_indices = @transform_8, window_bounds = array<i64: 1, 8>}, {transform_indices = @transform_9, window_bounds = array<i64: 24, 8>}]} {
    %c0 = arith.constant 0 : index
    %c0_0 = arith.constant 0 : index
    %0 = vector.load %arg1[%c0, %c0_0] : memref<24x32xf32, #tpu.memory_space<vmem>>, vector<24x32xf32>
    %1 = arith.truncf %0 : vector<24x32xf32> to vector<24x32xbf16>
    %c0_1 = arith.constant 0 : index
    %c0_2 = arith.constant 0 : index
    %2 = vector.load %arg2[%c0_1, %c0_2] : memref<32x256xbf16, #tpu.memory_space<vmem>>, vector<32x256xbf16>
    %cst = arith.constant dense<0.000000e+00> : vector<24x256xf32>
    %3 = tpu.matmul %1, %2, %cst {dimension_numbers = #tpu.dot_dimension_numbers<[1], [0], [0], [1], [0, 0, 1, 1], [], []>} : vector<24x32xbf16>, vector<32x256xbf16>, vector<24x256xf32> -> vector<24x256xf32>
    %c0_3 = arith.constant 0 : index
    %c0_4 = arith.constant 0 : index
    %4 = vector.load %arg3[%c0_3, %c0_4] : memref<1x256xf32, #tpu.memory_space<vmem>>, vector<1x256xf32>
    %5 = vector.broadcast %4 : vector<1x256xf32> to vector<24x256xf32>
    %6 = arith.addf %3, %5 : vector<24x256xf32>
    %cst_5 = arith.constant 0.000000e+00 : f32
    %7 = vector.broadcast %cst_5 : f32 to vector<24x256xf32>
    %8 = arith.maximumf %6, %7 : vector<24x256xf32>
    %9 = arith.truncf %8 : vector<24x256xf32> to vector<24x256xbf16>
    %c0_6 = arith.constant 0 : index
    %c0_7 = arith.constant 0 : index
    %10 = vector.load %arg4[%c0_6, %c0_7] : memref<256x256xbf16, #tpu.memory_space<vmem>>, vector<256x256xbf16>
    %cst_8 = arith.constant dense<0.000000e+00> : vector<24x256xf32>
    %11 = tpu.matmul %9, %10, %cst_8 {dimension_numbers = #tpu.dot_dimension_numbers<[1], [0], [0], [1], [0, 0, 1, 1], [], []>} : vector<24x256xbf16>, vector<256x256xbf16>, vector<24x256xf32> -> vector<24x256xf32>
    %c0_9 = arith.constant 0 : index
    %c0_10 = arith.constant 0 : index
    %12 = vector.load %arg5[%c0_9, %c0_10] : memref<1x256xf32, #tpu.memory_space<vmem>>, vector<1x256xf32>
    %13 = vector.broadcast %12 : vector<1x256xf32> to vector<24x256xf32>
    %14 = arith.addf %11, %13 : vector<24x256xf32>
    %cst_11 = arith.constant 0.000000e+00 : f32
    %15 = vector.broadcast %cst_11 : f32 to vector<24x256xf32>
    %16 = arith.maximumf %14, %15 : vector<24x256xf32>
    %17 = arith.truncf %16 : vector<24x256xf32> to vector<24x256xbf16>
    %c0_12 = arith.constant 0 : index
    %c0_13 = arith.constant 0 : index
    %18 = vector.load %arg6[%c0_12, %c0_13] : memref<256x256xbf16, #tpu.memory_space<vmem>>, vector<256x256xbf16>
    %cst_14 = arith.constant dense<0.000000e+00> : vector<24x256xf32>
    %19 = tpu.matmul %17, %18, %cst_14 {dimension_numbers = #tpu.dot_dimension_numbers<[1], [0], [0], [1], [0, 0, 1, 1], [], []>} : vector<24x256xbf16>, vector<256x256xbf16>, vector<24x256xf32> -> vector<24x256xf32>
    %c0_15 = arith.constant 0 : index
    %c0_16 = arith.constant 0 : index
    %20 = vector.load %arg7[%c0_15, %c0_16] : memref<1x256xf32, #tpu.memory_space<vmem>>, vector<1x256xf32>
    %21 = vector.broadcast %20 : vector<1x256xf32> to vector<24x256xf32>
    %22 = arith.addf %19, %21 : vector<24x256xf32>
    %cst_17 = arith.constant 0.000000e+00 : f32
    %23 = vector.broadcast %cst_17 : f32 to vector<24x256xf32>
    %24 = arith.maximumf %22, %23 : vector<24x256xf32>
    %25 = arith.truncf %24 : vector<24x256xf32> to vector<24x256xbf16>
    %c0_18 = arith.constant 0 : index
    %c0_19 = arith.constant 0 : index
    %26 = vector.load %arg8[%c0_18, %c0_19] : memref<256x8xbf16, #tpu.memory_space<vmem>>, vector<256x8xbf16>
    %cst_20 = arith.constant dense<0.000000e+00> : vector<24x8xf32>
    %27 = tpu.matmul %25, %26, %cst_20 {dimension_numbers = #tpu.dot_dimension_numbers<[1], [0], [0], [1], [0, 0, 1, 1], [], []>} : vector<24x256xbf16>, vector<256x8xbf16>, vector<24x8xf32> -> vector<24x8xf32>
    %c0_21 = arith.constant 0 : index
    %c0_22 = arith.constant 0 : index
    %28 = vector.load %arg9[%c0_21, %c0_22] : memref<1x8xf32, #tpu.memory_space<vmem>>, vector<1x8xf32>
    %29 = vector.broadcast %28 : vector<1x8xf32> to vector<24x8xf32>
    %30 = arith.addf %27, %29 : vector<24x8xf32>
    %c0_23 = arith.constant 0 : index
    %c0_24 = arith.constant 0 : index
    %31 = vector.load %arg10[%c0_23, %c0_24] : memref<24x8xf32, #tpu.memory_space<vmem>>, vector<24x8xf32>
    tpu.vector_store %arg10[%c0_23, %c0_24], %30 {strides = array<i32>} : memref<24x8xf32, #tpu.memory_space<vmem>>, vector<24x8xf32>,
    return
  }
  func.func @transform_0(%arg0: i32) -> (i32, i32) {
    %c0_i32 = arith.constant 0 : i32
    %c0_i32_0 = arith.constant 0 : i32
    return %arg0, %c0_i32 : i32, i32
  }
  func.func @transform_1(%arg0: i32) -> (i32, i32) {
    %c0_i32 = arith.constant 0 : i32
    %c0_i32_0 = arith.constant 0 : i32
    %c0_i32_1 = arith.constant 0 : i32
    return %c0_i32, %c0_i32_0 : i32, i32
  }
  func.func @transform_2(%arg0: i32) -> (i32, i32) {
    %c0_i32 = arith.constant 0 : i32
    %c0_i32_0 = arith.constant 0 : i32
    %c0_i32_1 = arith.constant 0 : i32
    return %c0_i32, %c0_i32_0 : i32, i32
  }
  func.func @transform_3(%arg0: i32) -> (i32, i32) {
    %c0_i32 = arith.constant 0 : i32
    %c0_i32_0 = arith.constant 0 : i32
    %c0_i32_1 = arith.constant 0 : i32
    return %c0_i32, %c0_i32_0 : i32, i32
  }
  func.func @transform_4(%arg0: i32) -> (i32, i32) {
    %c0_i32 = arith.constant 0 : i32
    %c0_i32_0 = arith.constant 0 : i32
    %c0_i32_1 = arith.constant 0 : i32
    return %c0_i32, %c0_i32_0 : i32, i32
  }
  func.func @transform_5(%arg0: i32) -> (i32, i32) {
    %c0_i32 = arith.constant 0 : i32
    %c0_i32_0 = arith.constant 0 : i32
    %c0_i32_1 = arith.constant 0 : i32
    return %c0_i32, %c0_i32_0 : i32, i32
  }
  func.func @transform_6(%arg0: i32) -> (i32, i32) {
    %c0_i32 = arith.constant 0 : i32
    %c0_i32_0 = arith.constant 0 : i32
    %c0_i32_1 = arith.constant 0 : i32
    return %c0_i32, %c0_i32_0 : i32, i32
  }
  func.func @transform_7(%arg0: i32) -> (i32, i32) {
    %c0_i32 = arith.constant 0 : i32
    %c0_i32_0 = arith.constant 0 : i32
    %c0_i32_1 = arith.constant 0 : i32
    return %c0_i32, %c0_i32_0 : i32, i32
  }
  func.func @transform_8(%arg0: i32) -> (i32, i32) {
    %c0_i32 = arith.constant 0 : i32
    %c0_i32_0 = arith.constant 0 : i32
    %c0_i32_1 = arith.constant 0 : i32
    return %c0_i32, %c0_i32_0 : i32, i32
  }
  func.func @transform_9(%arg0: i32) -> (i32, i32) {
    %c0_i32 = arith.constant 0 : i32
    %c0_i32_0 = arith.constant 0 : i32
    return %arg0, %c0_i32 : i32, i32
  }
}

</mosaic_0001>

<llo_original>
// kernel: dqn_forward.1
$region0: #{dqn_forward.1}
  #allocation0 [shape = 'u32[]', space=smem, size = 0x4, offset = 0x4, fixed_abs, tag = 'smem constant byte address 0x4 - core index']
  #allocation1 [shape = 'u32[72,128]{1,0:T(1,128)}', space=vmem, size = 0x9000, scoped, tag = 'internal scratch']
  %s0 = inlined_call_operand.vmem [shape: f32[24,32], index: 0, kind: input, shape index: {}]
  %s1 = inlined_call_operand.vmem [shape: bf16[32,256], index: 1, kind: input, shape index: {}]
  %s2 = inlined_call_operand.vmem [shape: f32[1,256], index: 2, kind: input, shape index: {}]
  %s3 = inlined_call_operand.hbm [shape: bf16[256,256], index: 3, kind: input, shape index: {}]
  %s4 = inlined_call_operand.vmem [shape: f32[1,256], index: 4, kind: input, shape index: {}]
  %s5 = inlined_call_operand.hbm [shape: bf16[256,256], index: 5, kind: input, shape index: {}]
  %s6 = inlined_call_operand.vmem [shape: f32[1,256], index: 6, kind: input, shape index: {}]
  %s7 = inlined_call_operand.vmem [shape: bf16[256,8], index: 7, kind: input, shape index: {}]
  %s8 = inlined_call_operand.vmem [shape: f32[1,8], index: 8, kind: input, shape index: {}]
  %s9 = inlined_call_operand.vmem [shape: f32[24,8], index: 9, kind: output, shape index: {}]
  %s10 = sld [smem:[#allocation0]]
  $region54: #{dqn_forward.1} parent=0
    _
  %s12 = ssub.s32 1, %s10
  %s13 = scalar_select 0, %s12, %s10
  $region1: #{dqn_forward.1} parent=0
    #allocation2 [shape = 'u8[131072]{0}', space=vmem, size = 0x20000, scoped, tag = 'input window, operand 3, single buffered']
    #allocation3 [shape = 's32[1]{0}', space=sflag, size = 0x4, scoped, tag = 'scoped memory for dqn_forward.1']
    #allocation4 [shape = 'u8[131072]{0}', space=vmem, size = 0x20000, scoped, tag = 'input window, operand 5, single buffered']
    #allocation5 [shape = 's32[1]{0}', space=sflag, size = 0x4, scoped, tag = 'scoped memory for dqn_forward.1']
    %14 = vsyncpa [#allocation3], 0
    %15 = vsyncpa [#allocation5], 0
    // Predicated region
    $region2: #{dqn_forward.1} parent=1 // pred_check
      _
    $region3: #{dqn_forward.1} parent=1 // pred_check_branch
      %17 = sbr.rel (0) target = $region5
    $region4: #{dqn_forward.1} parent=1 // pred_region
      _
    $region5: #{dqn_forward.1} parent=1 // pred_fallthru
      _
    // Predicated region
    $region6: #{dqn_forward.1} parent=1 // pred_check
      _
    $region7: #{dqn_forward.1} parent=1 // pred_check_branch
      %19 = sbr.rel (0) target = $region9
    $region8: #{dqn_forward.1} parent=1 // pred_region
      _
    $region9: #{dqn_forward.1} parent=1 // pred_fallthru
      _
    // Predicated region
    $region10: #{dqn_forward.1} parent=1 // pred_check
      _
    $region11: #{dqn_forward.1} parent=1 // pred_check_branch
      %21 = sbr.rel (0) target = $region13
    $region12: #{dqn_forward.1} parent=1 // pred_region
      _
    $region13: #{dqn_forward.1} parent=1 // pred_fallthru
      _
    // Predicated region
    $region14: #{dqn_forward.1} parent=1 // pred_check
      _
    $region15: #{dqn_forward.1} parent=1 // pred_check_branch
      %23 = sbr.rel (0) target = $region17
    $region16: #{dqn_forward.1} parent=1 // pred_region
      %25 = vsyncadd [#allocation3], 0
      %s26 = sshll.u32 %s3, 4
      %s27 = int_to_ptr.hbm [resolvable:$true] %s26
      %s28 = sshll.u32 [#allocation2], 4
      %s29 = int_to_ptr.vmem [resolvable:$true] %s28
      %34 = dma.hbm_to_vmem [thread:$0]  %s27, 4096, %s29, [#allocation3], 128, 128, 8
    $region17: #{dqn_forward.1} parent=1 // pred_fallthru
      _
    // Predicated region
    $region18: #{dqn_forward.1} parent=1 // pred_check
      _
    $region19: #{dqn_forward.1} parent=1 // pred_check_branch
      %36 = sbr.rel (0) target = $region21
    $region20: #{dqn_forward.1} parent=1 // pred_region
      _
    $region21: #{dqn_forward.1} parent=1 // pred_fallthru
      _
    // Predicated region
    $region22: #{dqn_forward.1} parent=1 // pred_check
      _
    $region23: #{dqn_forward.1} parent=1 // pred_check_branch
      %38 = sbr.rel (0) target = $region25
    $region24: #{dqn_forward.1} parent=1 // pred_region
      %40 = vsyncadd [#allocation5], 0
      %s41 = sshll.u32 %s5, 4
      %s42 = int_to_ptr.hbm [resolvable:$true] %s41
      %s43 = sshll.u32 [#allocation4], 4
      %s44 = int_to_ptr.vmem [resolvable:$true] %s43
      %49 = dma.hbm_to_vmem [thread:$0]  %s42, 4096, %s44, [#allocation5], 128, 128, 8
    $region25: #{dqn_forward.1} parent=1 // pred_fallthru
      _
    // Predicated region
    $region26: #{dqn_forward.1} parent=1 // pred_check
      _
    $region27: #{dqn_forward.1} parent=1 // pred_check_branch
      %51 = sbr.rel (0) target = $region29
    $region28: #{dqn_forward.1} parent=1 // pred_region
      _
    $region29: #{dqn_forward.1} parent=1 // pred_fallthru
      _
    // Predicated region
    $region30: #{dqn_forward.1} parent=1 // pred_check
      _
    $region31: #{dqn_forward.1} parent=1 // pred_check_branch
      %53 = sbr.rel (0) target = $region33
    $region32: #{dqn_forward.1} parent=1 // pred_region
      _
    $region33: #{dqn_forward.1} parent=1 // pred_fallthru
      _
    // Predicated region
    $region34: #{dqn_forward.1} parent=1 // pred_check
      _
    $region35: #{dqn_forward.1} parent=1 // pred_check_branch
      %55 = sbr.rel (0) target = $region37
    $region36: #{dqn_forward.1} parent=1 // pred_region
      _
    $region37: #{dqn_forward.1} parent=1 // pred_fallthru
      _
    // Predicated region
    $region38: #{dqn_forward.1} parent=1 // pred_check
      _
    $region39: #{dqn_forward.1} parent=1 // pred_check_branch
      %57 = sbr.rel (0) target = $region41
    $region40: #{dqn_forward.1} parent=1 // pred_region
      %59 = dma.done [#allocation3], 4096
    $region41: #{dqn_forward.1} parent=1 // pred_fallthru
      _
    // Predicated region
    $region42: #{dqn_forward.1} parent=1 // pred_check
      _
    $region43: #{dqn_forward.1} parent=1 // pred_check_branch
      %61 = sbr.rel (0) target = $region45
    $region44: #{dqn_forward.1} parent=1 // pred_region
      %63 = dma.done [#allocation5], 4096
    $region45: #{dqn_forward.1} parent=1 // pred_fallthru
      _
    %v65 = vld [vmem:[%s0] sm:$0xff]
    %v66 = vld [vmem:[%s0 + $0x8] sm:$0xff]
    %v67 = vld [vmem:[%s0 + $0x10] sm:$0xff]
    %v68 = vpack.c.bf16 %v66, %v65
    %v69 = vpack.c.bf16 %v67, %v67
    %v70 = vld [vmem:[%s1] sm:$0xff]
    %v71 = vld [vmem:[%s1 + $0x8] sm:$0xff]
    %v72 = vld [vmem:[%s1 + $0x10] sm:$0xff]
    %v73 = vld [vmem:[%s1 + $0x18] sm:$0xff]
    %v74 = vld [vmem:[%s2] sm:$0x3]
    %v76 = vperm.slane %v74, 0
    %v77 = vperm.slane %v74, 1
    %v84 = vunpack.c.l.b16 %v70
    %v85 = vunpack.c.h.b16 %v70
    %v86 = vunpack.c.l.b16 %v71
    %v87 = vunpack.c.h.b16 %v71
    %v88 = vunpack.c.l.b16 %v72
    %v89 = vunpack.c.h.b16 %v72
    %v90 = vunpack.c.l.b16 %v73
    %v91 = vunpack.c.h.b16 %v73
    %v92 = vpack.c.b16 %v86, %v84
    %v93 = vpack.c.b16 %v87, %v85
    %v94 = vpack.c.b16 %v90, %v88
    %v95 = vpack.c.b16 %v91, %v89
    %vm100 = vcmask 261120
    %v102 = vsel %vm100, %v68, 0
    %v105 = vsel %vm100, %v69, 0
    %107 = vmatpush.bf16.msra.mxu0 0
    %108 = vmatpush.bf16.msra.mxu0 0
    %109 = vmatpush.bf16.msra.mxu0 0
    %110 = vmatpush.bf16.msra.mxu0 0
    %111 = vmatpush.bf16.msra.mxu0 0
    %112 = vmatpush.bf16.msra.mxu0 0
    %113 = vmatpush.bf16.msra.mxu0 %v94
    %114 = vmatpush.bf16.msra.mxu0 %v92
    %115 = vmatmul.bf16.gmra.mxu0 %v102
    %v116 = vpop.f32.mrf.mxu0
    %v117 = vadd.f32 %v76, %v116
    %v118 = vpop.f32.mrf.mxu0
    %v119 = vadd.f32 %v76, %v118
    %120 = vmatmul.bf16.gmra.mxu0 %v105
    %v121 = vpop.f32.mrf.mxu0
    %v122 = vadd.f32 %v76, %v121
    %v123 = vpop.f32.mrf.mxu0
    %124 = vdwg.mxu0
    %125 = vmatpush.bf16.msra.mxu0 0
    %126 = vmatpush.bf16.msra.mxu0 0
    %127 = vmatpush.bf16.msra.mxu0 0
    %128 = vmatpush.bf16.msra.mxu0 0
    %129 = vmatpush.bf16.msra.mxu0 0
    %130 = vmatpush.bf16.msra.mxu0 0
    %131 = vmatpush.bf16.msra.mxu0 %v95
    %132 = vmatpush.bf16.msra.mxu0 %v93
    %133 = vmatmul.bf16.gmra.mxu0 %v102
    %v134 = vpop.f32.mrf.mxu0
    %v135 = vadd.f32 %v77, %v134
    %v136 = vpop.f32.mrf.mxu0
    %v137 = vadd.f32 %v77, %v136
    %138 = vmatmul.bf16.gmra.mxu0 %v105
    %v139 = vpop.f32.mrf.mxu0
    %v140 = vadd.f32 %v77, %v139
    %v141 = vpop.f32.mrf.mxu0
    %142 = vdwg.mxu0
    %v143 = vmax.f32 %v117, 0.0
    %v144 = vmax.f32 %v135, 0.0
    %v145 = vmax.f32 %v119, 0.0
    %v146 = vmax.f32 %v137, 0.0
    %v147 = vmax.f32 %v122, 0.0
    %v148 = vmax.f32 %v140, 0.0
    %v149 = vpack.c.bf16 %v145, %v143
    %v150 = vpack.c.bf16 %v146, %v144
    %v151 = vpack.c.bf16 %v147, %v147
    %v152 = vpack.c.bf16 %v148, %v148
    %v153 = vld [vmem:[#allocation2] sm:$0xff]
    %v154 = vld [vmem:[#allocation2 + $0x8] sm:$0xff]
    %v155 = vld [vmem:[#allocation2 + $0x10] sm:$0xff]
    %v156 = vld [vmem:[#allocation2 + $0x18] sm:$0xff]
    %v157 = vld [vmem:[#allocation2 + $0x20] sm:$0xff]
    %v158 = vld [vmem:[#allocation2 + $0x28] sm:$0xff]
    %v159 = vld [vmem:[#allocation2 + $0x30] sm:$0xff]
    %v160 = vld [vmem:[#allocation2 + $0x38] sm:$0xff]
    %v161 = vld [vmem:[#allocation2 + $0x40] sm:$0xff]
    %v162 = vld [vmem:[#allocation2 + $0x48] sm:$0xff]
    %v163 = vld [vmem:[#allocation2 + $0x50] sm:$0xff]
    %v164 = vld [vmem:[#allocation2 + $0x58] sm:$0xff]
    %v165 = vld [vmem:[#allocation2 + $0x60] sm:$0xff]
    %v166 = vld [vmem:[#allocation2 + $0x68] sm:$0xff]
    %v167 = vld [vmem:[#allocation2 + $0x70] sm:$0xff]
    %v168 = vld [vmem:[#allocation2 + $0x78] sm:$0xff]
    %v169 = vld [vmem:[#allocation2 + $0x80] sm:$0xff]
    %v170 = vld [vmem:[#allocation2 + $0x88] sm:$0xff]
    %v171 = vld [vmem:[#allocation2 + $0x90] sm:$0xff]
    %v172 = vld [vmem:[#allocation2 + $0x98] sm:$0xff]
    %v173 = vld [vmem:[#allocation2 + $0xa0] sm:$0xff]
    %v174 = vld [vmem:[#allocation2 + $0xa8] sm:$0xff]
    %v175 = vld [vmem:[#allocation2 + $0xb0] sm:$0xff]
    %v176 = vld [vmem:[#allocation2 + $0xb8] sm:$0xff]
    %v177 = vld [vmem:[#allocation2 + $0xc0] sm:$0xff]
    %v178 = vld [vmem:[#allocation2 + $0xc8] sm:$0xff]
    %v179 = vld [vmem:[#allocation2 + $0xd0] sm:$0xff]
    %v180 = vld [vmem:[#allocation2 + $0xd8] sm:$0xff]
    %v181 = vld [vmem:[#allocation2 + $0xe0] sm:$0xff]
    %v182 = vld [vmem:[#allocation2 + $0xe8] sm:$0xff]
    %v183 = vld [vmem:[#allocation2 + $0xf0] sm:$0xff]
    %v184 = vld [vmem:[#allocation2 + $0xf8] sm:$0xff]
    %v185 = vld [vmem:[%s4] sm:$0x3]
    %v187 = vperm.slane %v185, 0
    %v188 = vperm.slane %v185, 1
    %v223 = vunpack.c.l.b16 %v153
    %v224 = vunpack.c.h.b16 %v153
    %v225 = vunpack.c.l.b16 %v154
    %v226 = vunpack.c.h.b16 %v154
    %v227 = vunpack.c.l.b16 %v155
    %v228 = vunpack.c.h.b16 %v155
    %v229 = vunpack.c.l.b16 %v156
    %v230 = vunpack.c.h.b16 %v156
    %v231 = vunpack.c.l.b16 %v157
    %v232 = vunpack.c.h.b16 %v157
    %v233 = vunpack.c.l.b16 %v158
    %v234 = vunpack.c.h.b16 %v158
    %v235 = vunpack.c.l.b16 %v159
    %v236 = vunpack.c.h.b16 %v159
    %v237 = vunpack.c.l.b16 %v160
    %v238 = vunpack.c.h.b16 %v160
    %v239 = vunpack.c.l.b16 %v161
    %v240 = vunpack.c.h.b16 %v161
    %v241 = vunpack.c.l.b16 %v162
    %v242 = vunpack.c.h.b16 %v162
    %v243 = vunpack.c.l.b16 %v163
    %v244 = vunpack.c.h.b16 %v163
    %v245 = vunpack.c.l.b16 %v164
    %v246 = vunpack.c.h.b16 %v164
    %v247 = vunpack.c.l.b16 %v165
    %v248 = vunpack.c.h.b16 %v165
    %v249 = vunpack.c.l.b16 %v166
    %v250 = vunpack.c.h.b16 %v166
    %v251 = vunpack.c.l.b16 %v167
    %v252 = vunpack.c.h.b16 %v167
    %v253 = vunpack.c.l.b16 %v168
    %v254 = vunpack.c.h.b16 %v168
    %v255 = vunpack.c.l.b16 %v169
    %v256 = vunpack.c.h.b16 %v169
    %v257 = vunpack.c.l.b16 %v170
    %v258 = vunpack.c.h.b16 %v170
    %v259 = vunpack.c.l.b16 %v171
    %v260 = vunpack.c.h.b16 %v171
    %v261 = vunpack.c.l.b16 %v172
    %v262 = vunpack.c.h.b16 %v172
    %v263 = vunpack.c.l.b16 %v173
    %v264 = vunpack.c.h.b16 %v173
    %v265 = vunpack.c.l.b16 %v174
    %v266 = vunpack.c.h.b16 %v174
    %v267 = vunpack.c.l.b16 %v175
    %v268 = vunpack.c.h.b16 %v175
    %v269 = vunpack.c.l.b16 %v176
    %v270 = vunpack.c.h.b16 %v176
    %v271 = vunpack.c.l.b16 %v177
    %v272 = vunpack.c.h.b16 %v177
    %v273 = vunpack.c.l.b16 %v178
    %v274 = vunpack.c.h.b16 %v178
    %v275 = vunpack.c.l.b16 %v179
    %v276 = vunpack.c.h.b16 %v179
    %v277 = vunpack.c.l.b16 %v180
    %v278 = vunpack.c.h.b16 %v180
    %v279 = vunpack.c.l.b16 %v181
    %v280 = vunpack.c.h.b16 %v181
    %v281 = vunpack.c.l.b16 %v182
    %v282 = vunpack.c.h.b16 %v182
    %v283 = vunpack.c.l.b16 %v183
    %v284 = vunpack.c.h.b16 %v183
    %v285 = vunpack.c.l.b16 %v184
    %v286 = vunpack.c.h.b16 %v184
    %v287 = vpack.c.b16 %v225, %v223
    %v288 = vpack.c.b16 %v226, %v224
    %v289 = vpack.c.b16 %v229, %v227
    %v290 = vpack.c.b16 %v230, %v228
    %v291 = vpack.c.b16 %v233, %v231
    %v292 = vpack.c.b16 %v234, %v232
    %v293 = vpack.c.b16 %v237, %v235
    %v294 = vpack.c.b16 %v238, %v236
    %v295 = vpack.c.b16 %v241, %v239
    %v296 = vpack.c.b16 %v242, %v240
    %v297 = vpack.c.b16 %v245, %v243
    %v298 = vpack.c.b16 %v246, %v244
    %v299 = vpack.c.b16 %v249, %v247
    %v300 = vpack.c.b16 %v250, %v248
    %v301 = vpack.c.b16 %v253, %v251
    %v302 = vpack.c.b16 %v254, %v252
    %v303 = vpack.c.b16 %v257, %v255
    %v304 = vpack.c.b16 %v258, %v256
    %v305 = vpack.c.b16 %v261, %v259
    %v306 = vpack.c.b16 %v262, %v260
    %v307 = vpack.c.b16 %v265, %v263
    %v308 = vpack.c.b16 %v266, %v264
    %v309 = vpack.c.b16 %v269, %v267
    %v310 = vpack.c.b16 %v270, %v268
    %v311 = vpack.c.b16 %v273, %v271
    %v312 = vpack.c.b16 %v274, %v272
    %v313 = vpack.c.b16 %v277, %v275
    %v314 = vpack.c.b16 %v278, %v276
    %v315 = vpack.c.b16 %v281, %v279
    %v316 = vpack.c.b16 %v282, %v280
    %v317 = vpack.c.b16 %v285, %v283
    %v318 = vpack.c.b16 %v286, %v284
    %351 = vmatpush.bf16.msra.mxu0 %v301
    %352 = vmatpush.bf16.msra.mxu0 %v299
    %353 = vmatpush.bf16.msra.mxu0 %v297
    %354 = vmatpush.bf16.msra.mxu0 %v295
    %355 = vmatpush.bf16.msra.mxu0 %v293
    %356 = vmatpush.bf16.msra.mxu0 %v291
    %357 = vmatpush.bf16.msra.mxu0 %v289
    %358 = vmatpush.bf16.msra.mxu0 %v287
    %359 = vmatmul.bf16.gmra.mxu0 %v149
    %v360 = vpop.f32.mrf.mxu0
    %v361 = vadd.f32 %v187, %v360
    %v362 = vpop.f32.mrf.mxu0
    %v363 = vadd.f32 %v187, %v362
    %364 = vmatmul.bf16.gmra.mxu0 %v151
    %v365 = vpop.f32.mrf.mxu0
    %v366 = vadd.f32 %v187, %v365
    %v367 = vpop.f32.mrf.mxu0
    %368 = vdwg.mxu0
    %369 = vmatpush.bf16.msra.mxu0 %v317
    %370 = vmatpush.bf16.msra.mxu0 %v315
    %371 = vmatpush.bf16.msra.mxu0 %v313
    %372 = vmatpush.bf16.msra.mxu0 %v311
    %373 = vmatpush.bf16.msra.mxu0 %v309
    %374 = vmatpush.bf16.msra.mxu0 %v307
    %375 = vmatpush.bf16.msra.mxu0 %v305
    %376 = vmatpush.bf16.msra.mxu0 %v303
    %377 = vmatmul.bf16.gmra.mxu0 %v150
    %v378 = vpop.f32.mrf.mxu0
    %v379 = vadd.f32 %v361, %v378
    %v380 = vpop.f32.mrf.mxu0
    %v381 = vadd.f32 %v363, %v380
    %382 = vmatmul.bf16.gmra.mxu0 %v152
    %v383 = vpop.f32.mrf.mxu0
    %v384 = vadd.f32 %v366, %v383
    %v385 = vpop.f32.mrf.mxu0
    %386 = vdwg.mxu0
    %387 = vmatpush.bf16.msra.mxu0 %v302
    %388 = vmatpush.bf16.msra.mxu0 %v300
    %389 = vmatpush.bf16.msra.mxu0 %v298
    %390 = vmatpush.bf16.msra.mxu0 %v296
    %391 = vmatpush.bf16.msra.mxu0 %v294
    %392 = vmatpush.bf16.msra.mxu0 %v292
    %393 = vmatpush.bf16.msra.mxu0 %v290
    %394 = vmatpush.bf16.msra.mxu0 %v288
    %395 = vmatmul.bf16.gmra.mxu0 %v149
    %v396 = vpop.f32.mrf.mxu0
    %v397 = vadd.f32 %v188, %v396
    %v398 = vpop.f32.mrf.mxu0
    %v399 = vadd.f32 %v188, %v398
    %400 = vmatmul.bf16.gmra.mxu0 %v151
    %v401 = vpop.f32.mrf.mxu0
    %v402 = vadd.f32 %v188, %v401
    %v403 = vpop.f32.mrf.mxu0
    %404 = vdwg.mxu0
    %405 = vmatpush.bf16.msra.mxu0 %v318
    %406 = vmatpush.bf16.msra.mxu0 %v316
    %407 = vmatpush.bf16.msra.mxu0 %v314
    %408 = vmatpush.bf16.msra.mxu0 %v312
    %409 = vmatpush.bf16.msra.mxu0 %v310
    %410 = vmatpush.bf16.msra.mxu0 %v308
    %411 = vmatpush.bf16.msra.mxu0 %v306
    %412 = vmatpush.bf16.msra.mxu0 %v304
    %413 = vmatmul.bf16.gmra.mxu0 %v150
    %v414 = vpop.f32.mrf.mxu0
    %v415 = vadd.f32 %v397, %v414
    %v416 = vpop.f32.mrf.mxu0
    %v417 = vadd.f32 %v399, %v416
    %418 = vmatmul.bf16.gmra.mxu0 %v152
    %v419 = vpop.f32.mrf.mxu0
    %v420 = vadd.f32 %v402, %v419
    %v421 = vpop.f32.mrf.mxu0
    %422 = vdwg.mxu0
    %v423 = vmax.f32 %v379, 0.0
    %v424 = vmax.f32 %v415, 0.0
    %v425 = vmax.f32 %v381, 0.0
    %v426 = vmax.f32 %v417, 0.0
    %v427 = vmax.f32 %v384, 0.0
    %v428 = vmax.f32 %v420, 0.0
    %v429 = vpack.c.bf16 %v425, %v423
    %v430 = vpack.c.bf16 %v426, %v424
    %v431 = vpack.c.bf16 %v427, %v427
    %v432 = vpack.c.bf16 %v428, %v428
    %v433 = vld [vmem:[#allocation4] sm:$0xff]
    %v434 = vld [vmem:[#allocation4 + $0x8] sm:$0xff]
    %v435 = vld [vmem:[#allocation4 + $0x10] sm:$0xff]
    %v436 = vld [vmem:[#allocation4 + $0x18] sm:$0xff]
    %v437 = vld [vmem:[#allocation4 + $0x20] sm:$0xff]
    %v438 = vld [vmem:[#allocation4 + $0x28] sm:$0xff]
    %v439 = vld [vmem:[#allocation4 + $0x30] sm:$0xff]
    %v440 = vld [vmem:[#allocation4 + $0x38] sm:$0xff]
    %v441 = vld [vmem:[#allocation4 + $0x40] sm:$0xff]
    %v442 = vld [vmem:[#allocation4 + $0x48] sm:$0xff]
    %v443 = vld [vmem:[#allocation4 + $0x50] sm:$0xff]
    %v444 = vld [vmem:[#allocation4 + $0x58] sm:$0xff]
    %v445 = vld [vmem:[#allocation4 + $0x60] sm:$0xff]
    %v446 = vld [vmem:[#allocation4 + $0x68] sm:$0xff]
    %v447 = vld [vmem:[#allocation4 + $0x70] sm:$0xff]
    %v448 = vld [vmem:[#allocation4 + $0x78] sm:$0xff]
    %v449 = vld [vmem:[#allocation4 + $0x80] sm:$0xff]
    %v450 = vld [vmem:[#allocation4 + $0x88] sm:$0xff]
    %v451 = vld [vmem:[#allocation4 + $0x90] sm:$0xff]
    %v452 = vld [vmem:[#allocation4 + $0x98] sm:$0xff]
    %v453 = vld [vmem:[#allocation4 + $0xa0] sm:$0xff]
    %v454 = vld [vmem:[#allocation4 + $0xa8] sm:$0xff]
    %v455 = vld [vmem:[#allocation4 + $0xb0] sm:$0xff]
    %v456 = vld [vmem:[#allocation4 + $0xb8] sm:$0xff]
    %v457 = vld [vmem:[#allocation4 + $0xc0] sm:$0xff]
    %v458 = vld [vmem:[#allocation4 + $0xc8] sm:$0xff]
    %v459 = vld [vmem:[#allocation4 + $0xd0] sm:$0xff]
    %v460 = vld [vmem:[#allocation4 + $0xd8] sm:$0xff]
    %v461 = vld [vmem:[#allocation4 + $0xe0] sm:$0xff]
    %v462 = vld [vmem:[#allocation4 + $0xe8] sm:$0xff]
    %v463 = vld [vmem:[#allocation4 + $0xf0] sm:$0xff]
    %v464 = vld [vmem:[#allocation4 + $0xf8] sm:$0xff]
    %v465 = vld [vmem:[%s6] sm:$0x3]
    %v467 = vperm.slane %v465, 0
    %v468 = vperm.slane %v465, 1
    %v503 = vunpack.c.l.b16 %v433
    %v504 = vunpack.c.h.b16 %v433
    %v505 = vunpack.c.l.b16 %v434
    %v506 = vunpack.c.h.b16 %v434
    %v507 = vunpack.c.l.b16 %v435
    %v508 = vunpack.c.h.b16 %v435
    %v509 = vunpack.c.l.b16 %v436
    %v510 = vunpack.c.h.b16 %v436
    %v511 = vunpack.c.l.b16 %v437
    %v512 = vunpack.c.h.b16 %v437
    %v513 = vunpack.c.l.b16 %v438
    %v514 = vunpack.c.h.b16 %v438
    %v515 = vunpack.c.l.b16 %v439
    %v516 = vunpack.c.h.b16 %v439
    %v517 = vunpack.c.l.b16 %v440
    %v518 = vunpack.c.h.b16 %v440
    %v519 = vunpack.c.l.b16 %v441
    %v520 = vunpack.c.h.b16 %v441
    %v521 = vunpack.c.l.b16 %v442
    %v522 = vunpack.c.h.b16 %v442
    %v523 = vunpack.c.l.b16 %v443
    %v524 = vunpack.c.h.b16 %v443
    %v525 = vunpack.c.l.b16 %v444
    %v526 = vunpack.c.h.b16 %v444
    %v527 = vunpack.c.l.b16 %v445
    %v528 = vunpack.c.h.b16 %v445
    %v529 = vunpack.c.l.b16 %v446
    %v530 = vunpack.c.h.b16 %v446
    %v531 = vunpack.c.l.b16 %v447
    %v532 = vunpack.c.h.b16 %v447
    %v533 = vunpack.c.l.b16 %v448
    %v534 = vunpack.c.h.b16 %v448
    %v535 = vunpack.c.l.b16 %v449
    %v536 = vunpack.c.h.b16 %v449
    %v537 = vunpack.c.l.b16 %v450
    %v538 = vunpack.c.h.b16 %v450
    %v539 = vunpack.c.l.b16 %v451
    %v540 = vunpack.c.h.b16 %v451
    %v541 = vunpack.c.l.b16 %v452
    %v542 = vunpack.c.h.b16 %v452
    %v543 = vunpack.c.l.b16 %v453
    %v544 = vunpack.c.h.b16 %v453
    %v545 = vunpack.c.l.b16 %v454
    %v546 = vunpack.c.h.b16 %v454
    %v547 = vunpack.c.l.b16 %v455
    %v548 = vunpack.c.h.b16 %v455
    %v549 = vunpack.c.l.b16 %v456
    %v550 = vunpack.c.h.b16 %v456
    %v551 = vunpack.c.l.b16 %v457
    %v552 = vunpack.c.h.b16 %v457
    %v553 = vunpack.c.l.b16 %v458
    %v554 = vunpack.c.h.b16 %v458
    %v555 = vunpack.c.l.b16 %v459
    %v556 = vunpack.c.h.b16 %v459
    %v557 = vunpack.c.l.b16 %v460
    %v558 = vunpack.c.h.b16 %v460
    %v559 = vunpack.c.l.b16 %v461
    %v560 = vunpack.c.h.b16 %v461
    %v561 = vunpack.c.l.b16 %v462
    %v562 = vunpack.c.h.b16 %v462
    %v563 = vunpack.c.l.b16 %v463
    %v564 = vunpack.c.h.b16 %v463
    %v565 = vunpack.c.l.b16 %v464
    %v566 = vunpack.c.h.b16 %v464
    %v567 = vpack.c.b16 %v505, %v503
    %v568 = vpack.c.b16 %v506, %v504
    %v569 = vpack.c.b16 %v509, %v507
    %v570 = vpack.c.b16 %v510, %v508
    %v571 = vpack.c.b16 %v513, %v511
    %v572 = vpack.c.b16 %v514, %v512
    %v573 = vpack.c.b16 %v517, %v515
    %v574 = vpack.c.b16 %v518, %v516
    %v575 = vpack.c.b16 %v521, %v519
    %v576 = vpack.c.b16 %v522, %v520
    %v577 = vpack.c.b16 %v525, %v523
    %v578 = vpack.c.b16 %v526, %v524
    %v579 = vpack.c.b16 %v529, %v527
    %v580 = vpack.c.b16 %v530, %v528
    %v581 = vpack.c.b16 %v533, %v531
    %v582 = vpack.c.b16 %v534, %v532
    %v583 = vpack.c.b16 %v537, %v535
    %v584 = vpack.c.b16 %v538, %v536
    %v585 = vpack.c.b16 %v541, %v539
    %v586 = vpack.c.b16 %v542, %v540
    %v587 = vpack.c.b16 %v545, %v543
    %v588 = vpack.c.b16 %v546, %v544
    %v589 = vpack.c.b16 %v549, %v547
    %v590 = vpack.c.b16 %v550, %v548
    %v591 = vpack.c.b16 %v553, %v551
    %v592 = vpack.c.b16 %v554, %v552
    %v593 = vpack.c.b16 %v557, %v555
    %v594 = vpack.c.b16 %v558, %v556
    %v595 = vpack.c.b16 %v561, %v559
    %v596 = vpack.c.b16 %v562, %v560
    %v597 = vpack.c.b16 %v565, %v563
    %v598 = vpack.c.b16 %v566, %v564
    %631 = vmatpush.bf16.msra.mxu0 %v581
    %632 = vmatpush.bf16.msra.mxu0 %v579
    %633 = vmatpush.bf16.msra.mxu0 %v577
    %634 = vmatpush.bf16.msra.mxu0 %v575
    %635 = vmatpush.bf16.msra.mxu0 %v573
    %636 = vmatpush.bf16.msra.mxu0 %v571
    %637 = vmatpush.bf16.msra.mxu0 %v569
    %638 = vmatpush.bf16.msra.mxu0 %v567
    %639 = vmatmul.bf16.gmra.mxu0 %v429
    %v640 = vpop.f32.mrf.mxu0
    %v641 = vadd.f32 %v467, %v640
    %v642 = vpop.f32.mrf.mxu0
    %v643 = vadd.f32 %v467, %v642
    %644 = vmatmul.bf16.gmra.mxu0 %v431
    %v645 = vpop.f32.mrf.mxu0
    %v646 = vadd.f32 %v467, %v645
    %v647 = vpop.f32.mrf.mxu0
    %648 = vdwg.mxu0
    %649 = vmatpush.bf16.msra.mxu0 %v597
    %650 = vmatpush.bf16.msra.mxu0 %v595
    %651 = vmatpush.bf16.msra.mxu0 %v593
    %652 = vmatpush.bf16.msra.mxu0 %v591
    %653 = vmatpush.bf16.msra.mxu0 %v589
    %654 = vmatpush.bf16.msra.mxu0 %v587
    %655 = vmatpush.bf16.msra.mxu0 %v585
    %656 = vmatpush.bf16.msra.mxu0 %v583
    %657 = vmatmul.bf16.gmra.mxu0 %v430
    %v658 = vpop.f32.mrf.mxu0
    %v659 = vadd.f32 %v641, %v658
    %v660 = vpop.f32.mrf.mxu0
    %v661 = vadd.f32 %v643, %v660
    %662 = vmatmul.bf16.gmra.mxu0 %v432
    %v663 = vpop.f32.mrf.mxu0
    %v664 = vadd.f32 %v646, %v663
    %v665 = vpop.f32.mrf.mxu0
    %666 = vdwg.mxu0
    %667 = vmatpush.bf16.msra.mxu0 %v582
    %668 = vmatpush.bf16.msra.mxu0 %v580
    %669 = vmatpush.bf16.msra.mxu0 %v578
    %670 = vmatpush.bf16.msra.mxu0 %v576
    %671 = vmatpush.bf16.msra.mxu0 %v574
    %672 = vmatpush.bf16.msra.mxu0 %v572
    %673 = vmatpush.bf16.msra.mxu0 %v570
    %674 = vmatpush.bf16.msra.mxu0 %v568
    %675 = vmatmul.bf16.gmra.mxu0 %v429
    %v676 = vpop.f32.mrf.mxu0
    %v677 = vadd.f32 %v468, %v676
    %v678 = vpop.f32.mrf.mxu0
    %v679 = vadd.f32 %v468, %v678
    %680 = vmatmul.bf16.gmra.mxu0 %v431
    %v681 = vpop.f32.mrf.mxu0
    %v682 = vadd.f32 %v468, %v681
    %v683 = vpop.f32.mrf.mxu0
    %684 = vdwg.mxu0
    %685 = vmatpush.bf16.msra.mxu0 %v598
    %686 = vmatpush.bf16.msra.mxu0 %v596
    %687 = vmatpush.bf16.msra.mxu0 %v594
    %688 = vmatpush.bf16.msra.mxu0 %v592
    %689 = vmatpush.bf16.msra.mxu0 %v590
    %690 = vmatpush.bf16.msra.mxu0 %v588
    %691 = vmatpush.bf16.msra.mxu0 %v586
    %692 = vmatpush.bf16.msra.mxu0 %v584
    %693 = vmatmul.bf16.gmra.mxu0 %v430
    %v694 = vpop.f32.mrf.mxu0
    %v695 = vadd.f32 %v677, %v694
    %v696 = vpop.f32.mrf.mxu0
    %v697 = vadd.f32 %v679, %v696
    %698 = vmatmul.bf16.gmra.mxu0 %v432
    %v699 = vpop.f32.mrf.mxu0
    %v700 = vadd.f32 %v682, %v699
    %v701 = vpop.f32.mrf.mxu0
    %702 = vdwg.mxu0
    %v703 = vmax.f32 %v659, 0.0
    %v704 = vmax.f32 %v695, 0.0
    %v705 = vmax.f32 %v661, 0.0
    %v706 = vmax.f32 %v697, 0.0
    %v707 = vmax.f32 %v664, 0.0
    %v708 = vmax.f32 %v700, 0.0
    %v709 = vpack.c.bf16 %v705, %v703
    %v710 = vpack.c.bf16 %v706, %v704
    %v711 = vpack.c.bf16 %v707, %v707
    %v712 = vpack.c.bf16 %v708, %v708
    %v713 = vld [vmem:[%s7] sm:$0xf]
    %v714 = vld [vmem:[%s7 + $0x4] sm:$0xf]
    %v715 = vld [vmem:[%s7 + $0x8] sm:$0xf]
    %v716 = vld [vmem:[%s7 + $0xc] sm:$0xf]
    %v717 = vld [vmem:[%s7 + $0x10] sm:$0xf]
    %v718 = vld [vmem:[%s7 + $0x14] sm:$0xf]
    %v719 = vld [vmem:[%s7 + $0x18] sm:$0xf]
    %v720 = vld [vmem:[%s7 + $0x1c] sm:$0xf]
    %v721 = vld [vmem:[%s7 + $0x20] sm:$0xf]
    %v722 = vld [vmem:[%s7 + $0x24] sm:$0xf]
    %v723 = vld [vmem:[%s7 + $0x28] sm:$0xf]
    %v724 = vld [vmem:[%s7 + $0x2c] sm:$0xf]
    %v725 = vld [vmem:[%s7 + $0x30] sm:$0xf]
    %v726 = vld [vmem:[%s7 + $0x34] sm:$0xf]
    %v727 = vld [vmem:[%s7 + $0x38] sm:$0xf]
    %v728 = vld [vmem:[%s7 + $0x3c] sm:$0xf]
    %v729 = vld [vmem:[%s7 + $0x40] sm:$0xf]
    %v730 = vld [vmem:[%s7 + $0x44] sm:$0xf]
    %v731 = vld [vmem:[%s7 + $0x48] sm:$0xf]
    %v732 = vld [vmem:[%s7 + $0x4c] sm:$0xf]
    %v733 = vld [vmem:[%s7 + $0x50] sm:$0xf]
    %v734 = vld [vmem:[%s7 + $0x54] sm:$0xf]
    %v735 = vld [vmem:[%s7 + $0x58] sm:$0xf]
    %v736 = vld [vmem:[%s7 + $0x5c] sm:$0xf]
    %v737 = vld [vmem:[%s7 + $0x60] sm:$0xf]
    %v738 = vld [vmem:[%s7 + $0x64] sm:$0xf]
    %v739 = vld [vmem:[%s7 + $0x68] sm:$0xf]
    %v740 = vld [vmem:[%s7 + $0x6c] sm:$0xf]
    %v741 = vld [vmem:[%s7 + $0x70] sm:$0xf]
    %v742 = vld [vmem:[%s7 + $0x74] sm:$0xf]
    %v743 = vld [vmem:[%s7 + $0x78] sm:$0xf]
    %v744 = vld [vmem:[%s7 + $0x7c] sm:$0xf]
    %v745 = vld [vmem:[%s8] sm:$0x1]
    %v747 = vperm.slane %v745, 0
    %v781 = vunpack.c.l.b16 %v713
    %v782 = vunpack.c.l.b16 %v714
    %v783 = vunpack.c.l.b16 %v715
    %v784 = vunpack.c.l.b16 %v716
    %v785 = vunpack.c.l.b16 %v717
    %v786 = vunpack.c.l.b16 %v718
    %v787 = vunpack.c.l.b16 %v719
    %v788 = vunpack.c.l.b16 %v720
    %v789 = vunpack.c.l.b16 %v721
    %v790 = vunpack.c.l.b16 %v722
    %v791 = vunpack.c.l.b16 %v723
    %v792 = vunpack.c.l.b16 %v724
    %v793 = vunpack.c.l.b16 %v725
    %v794 = vunpack.c.l.b16 %v726
    %v795 = vunpack.c.l.b16 %v727
    %v796 = vunpack.c.l.b16 %v728
    %v797 = vunpack.c.l.b16 %v729
    %v798 = vunpack.c.l.b16 %v730
    %v799 = vunpack.c.l.b16 %v731
    %v800 = vunpack.c.l.b16 %v732
    %v801 = vunpack.c.l.b16 %v733
    %v802 = vunpack.c.l.b16 %v734
    %v803 = vunpack.c.l.b16 %v735
    %v804 = vunpack.c.l.b16 %v736
    %v805 = vunpack.c.l.b16 %v737
    %v806 = vunpack.c.l.b16 %v738
    %v807 = vunpack.c.l.b16 %v739
    %v808 = vunpack.c.l.b16 %v740
    %v809 = vunpack.c.l.b16 %v741
    %v810 = vunpack.c.l.b16 %v742
    %v811 = vunpack.c.l.b16 %v743
    %v812 = vunpack.c.l.b16 %v744
    %v813 = vpack.c.b16 %v782, %v781
    %v814 = vpack.c.b16 %v784, %v783
    %v815 = vpack.c.b16 %v786, %v785
    %v816 = vpack.c.b16 %v788, %v787
    %v817 = vpack.c.b16 %v790, %v789
    %v818 = vpack.c.b16 %v792, %v791
    %v819 = vpack.c.b16 %v794, %v793
    %v820 = vpack.c.b16 %v796, %v795
    %v821 = vpack.c.b16 %v798, %v797
    %v822 = vpack.c.b16 %v800, %v799
    %v823 = vpack.c.b16 %v802, %v801
    %v824 = vpack.c.b16 %v804, %v803
    %v825 = vpack.c.b16 %v806, %v805
    %v826 = vpack.c.b16 %v808, %v807
    %v827 = vpack.c.b16 %v810, %v809
    %v828 = vpack.c.b16 %v812, %v811
    %845 = vmatpush.bf16.msra.mxu0 %v820
    %846 = vmatpush.bf16.msra.mxu0 %v819
    %847 = vmatpush.bf16.msra.mxu0 %v818
    %848 = vmatpush.bf16.msra.mxu0 %v817
    %849 = vmatpush.bf16.msra.mxu0 %v816
    %850 = vmatpush.bf16.msra.mxu0 %v815
    %851 = vmatpush.bf16.msra.mxu0 %v814
    %852 = vmatpush.bf16.msra.mxu0 %v813
    %853 = vmatmul.bf16.gmra.mxu0 %v709
    %v854 = vpop.f32.mrf.mxu0
    %v855 = vadd.f32 %v747, %v854
    %v856 = vpop.f32.mrf.mxu0
    %v857 = vadd.f32 %v747, %v856
    %858 = vmatmul.bf16.gmra.mxu0 %v711
    %v859 = vpop.f32.mrf.mxu0
    %v860 = vadd.f32 %v747, %v859
    %v861 = vpop.f32.mrf.mxu0
    %862 = vdwg.mxu0
    %863 = vmatpush.bf16.msra.mxu0 %v828
    %864 = vmatpush.bf16.msra.mxu0 %v827
    %865 = vmatpush.bf16.msra.mxu0 %v826
    %866 = vmatpush.bf16.msra.mxu0 %v825
    %867 = vmatpush.bf16.msra.mxu0 %v824
    %868 = vmatpush.bf16.msra.mxu0 %v823
    %869 = vmatpush.bf16.msra.mxu0 %v822
    %870 = vmatpush.bf16.msra.mxu0 %v821
    %871 = vmatmul.bf16.gmra.mxu0 %v710
    %v872 = vpop.f32.mrf.mxu0
    %v873 = vadd.f32 %v855, %v872
    %v874 = vpop.f32.mrf.mxu0
    %v875 = vadd.f32 %v857, %v874
    %876 = vmatmul.bf16.gmra.mxu0 %v712
    %v877 = vpop.f32.mrf.mxu0
    %v878 = vadd.f32 %v860, %v877
    %v879 = vpop.f32.mrf.mxu0
    %880 = vdwg.mxu0
    %vm881 = vcmask 64512
    %882 = vst.msk [vmem:[%s9] sm:$0xff] %vm881, %v873
    %883 = vst.msk [vmem:[%s9 + $0x8] sm:$0xff] %vm881, %v875
    %884 = vst.msk [vmem:[%s9 + $0x10] sm:$0xff] %vm881, %v878
    // Predicated region
    $region46: #{dqn_forward.1} parent=1 // pred_check
      _
    $region47: #{dqn_forward.1} parent=1 // pred_check_branch
      %886 = sbr.rel (0) target = $region49
    $region48: #{dqn_forward.1} parent=1 // pred_region
      _
    $region49: #{dqn_forward.1} parent=1 // pred_fallthru
      _
    // Predicated region
    $region50: #{dqn_forward.1} parent=1 // pred_check
      _
    $region51: #{dqn_forward.1} parent=1 // pred_check_branch
      %888 = sbr.rel (0) target = $region53
    $region52: #{dqn_forward.1} parent=1 // pred_region
      _
    $region53: #{dqn_forward.1} parent=1 // pred_fallthru
      _
    %889 = vsyncpa [#allocation3], 1
    %890 = vsyncpa [#allocation5], 1

</llo_original>
